<compile_context>
chip_gen: v5e
topology: v5e:2x2
jax: 0.10.0
libtpu: 0.0.40
codegen_flags: <defaults>
</compile_context>

<pallas_src>
import functools

import jax
import jax.numpy as jnp
from jax import lax
from jax.experimental import pallas as pl
from jax.experimental.pallas import tpu as pltpu


# ----------------------------------------------------------------------------
# Fused 6-layer GCN Pallas kernel
# ----------------------------------------------------------------------------
def fused_gcn_kernel(adj_ref, x_ref, w_ref, b_ref, pool_ref, super_ref,
                     h_ref, xw_ref):
    layer = pl.program_id(0)
    rtile = pl.program_id(1)
    num_layers = pl.num_programs(0)
    tm = adj_ref.shape[0]                    # row-tile height (static)

    # Feature transform once per layer (re-associated: X @ W before A @ (XW)),
    # cached in VMEM scratch so every adjacency row tile reuses it.  Layer 0
    # reads the resident padded inputs; later layers read the carried H.  All
    # reads of H_{l-1} happen here, before any row of H_l is written, so the
    # single H buffer can be overwritten in place.
    @pl.when((rtile == 0) & (layer == 0))
    def _():
        xw = jnp.dot(x_ref[...], w_ref[0], preferred_element_type=jnp.float32)
        xw_ref[...] = xw.astype(jnp.bfloat16)

    @pl.when((rtile == 0) & (layer > 0))
    def _():
        xw = jnp.dot(h_ref[...], w_ref[0], preferred_element_type=jnp.float32)
        xw_ref[...] = xw.astype(jnp.bfloat16)

    # Aggregate this row tile on the MXU: H_new = relu(A_tile @ XW + b).
    h_new = jnp.dot(adj_ref[...], xw_ref[...],
                    preferred_element_type=jnp.float32) + b_ref[0]
    h_new = jnp.maximum(h_new, 0.0).astype(jnp.bfloat16)

    # Carry H for the next layer (not needed after the last layer).
    row0 = pl.multiple_of(rtile * tm, tm)

    @pl.when(layer < num_layers - 1)
    def _():
        h_ref[pl.ds(row0, tm), :] = h_new

    # Per-graph mean pool (super node), accumulated per row tile into the
    # resident output block; single lane-dense [G, 128] block per layer.
    @pl.when(rtile == 0)
    def _():
        super_ref[...] = jnp.zeros_like(super_ref)

    super_ref[0] += jnp.dot(pool_ref[...], h_new,
                            preferred_element_type=jnp.float32)


def fused_gcn(adj, x_pad, w_stack, b_stack, pool, *, row_tile=None):
    n = adj.shape[0]
    num_layers = w_stack.shape[0]
    c = w_stack.shape[-1]
    g = pool.shape[0]
    if row_tile is None:
        # v7x has 64 MiB physical VMEM (32 MiB default scoped): keep adjacency
        # row tiles modest so (adj tile x 2 buffers + resident H/XW/pool) fits.
        row_tile = n if n <= 256 else 256
    assert n % row_tile == 0, "N must be a multiple of row_tile"
    n_rtiles = n // row_tile

    return pl.pallas_call(
        fused_gcn_kernel,
        out_shape=jax.ShapeDtypeStruct((num_layers, g, c), jnp.float32),
        grid_spec=pltpu.PrefetchScalarGridSpec(
            num_scalar_prefetch=0,
            grid=(num_layers, n_rtiles),
            in_specs=[
                # Adjacency row tile; block index is constant when n_rtiles == 1,
                # so A_hat is DMA'd once and stays resident across all 6 layers.
                pl.BlockSpec((row_tile, n), lambda l, r: (r, 0)),
                # Zero-padded input features: resident, only read at layer 0.
                pl.BlockSpec((n, c), lambda l, r: (0, 0)),
                # Per-layer weight / bias, selected by the layer grid index.
                pl.BlockSpec((1, c, c), lambda l, r: (l, 0, 0)),
                pl.BlockSpec((1, 1, c), lambda l, r: (l, 0, 0)),
                # Mean-pool column tile matching the adjacency row tile.
                pl.BlockSpec((g, row_tile), lambda l, r: (0, r)),
            ],
            out_specs=pl.BlockSpec((1, g, c), lambda l, r: (l, 0, 0)),
            scratch_shapes=[
                pltpu.VMEM((n, c), jnp.bfloat16),     # H carry (single buffer)
                pltpu.VMEM((n, c), jnp.bfloat16),     # per-layer X @ W cache
            ],
        ),
        compiler_params=pltpu.CompilerParams(
            # The layer axis carries state (scratch) and the row axis accumulates
            # into the resident H / super output -> both arbitrary.
            dimension_semantics=("arbitrary", "arbitrary"),
            vmem_limit_bytes=32 * 1024 * 1024,
        ),
    )(adj, x_pad, w_stack, b_stack, pool)


# ----------------------------------------------------------------------------
# JumpingKnowledge('lstm') -- bi-LSTM attention over layer outputs (plain JAX)
# ----------------------------------------------------------------------------
def _lstm_scan(x_seq, wih, whh, bih, bhh):
    # x_seq: [T, G, C]  ->  hidden states [T, G, H]
    g = x_seq.shape[1]
    h_dim = whh.shape[1]

    def step(carry, x_t):
        h, c = carry
        z = x_t @ wih.T + bih + h @ whh.T + bhh
        i, f, gg, o = jnp.split(z, 4, axis=-1)
        c = jax.nn.sigmoid(f) * c + jax.nn.sigmoid(i) * jnp.tanh(gg)
        h = jax.nn.sigmoid(o) * jnp.tanh(c)
        return (h, c), h

    init = (jnp.zeros((g, h_dim), jnp.float32), jnp.zeros((g, h_dim), jnp.float32))
    _, hs = lax.scan(step, init, x_seq)
    return hs


def jumping_knowledge_lstm(supers_tgc, jk):
    # supers_tgc: [T, G, C] super-node embeddings (T = num layers)
    h_f = _lstm_scan(supers_tgc, jk["wih_f"], jk["whh_f"], jk["bih_f"], jk["bhh_f"])
    h_b = _lstm_scan(supers_tgc[::-1], jk["wih_b"], jk["whh_b"],
                     jk["bih_b"], jk["bhh_b"])[::-1]
    alpha_in = jnp.concatenate([h_f, h_b], axis=-1)                       # [T, G, 2H]
    alpha = jnp.einsum("tgh,h->tg", alpha_in, jk["att_w"]) + jk["att_b"]  # [T, G]
    alpha = jax.nn.softmax(alpha, axis=0)                                 # over layers
    return jnp.einsum("tg,tgc->gc", alpha, supers_tgc)                    # [G, C]


# ----------------------------------------------------------------------------
# Graph preprocessing glue
# ----------------------------------------------------------------------------
def build_norm_adj(edge_index, num_nodes):
    a = jnp.zeros((num_nodes, num_nodes), jnp.float32)
    a = a.at[edge_index[0], edge_index[1]].set(1.0)
    a = a + jnp.eye(num_nodes, dtype=jnp.float32)
    deg = jnp.sum(a, axis=1)
    dinv = 1.0 / jnp.sqrt(jnp.maximum(deg, 1.0))
    return a * dinv[:, None] * dinv[None, :]


def build_mean_pool(batch, num_graphs):
    onehot = (batch[None, :] == jnp.arange(num_graphs)[:, None]).astype(jnp.float32)
    counts = jnp.maximum(jnp.sum(onehot, axis=1, keepdims=True), 1.0)
    return onehot / counts  # [G, N]


# ----------------------------------------------------------------------------
# Parameter construction (deterministic)
# ----------------------------------------------------------------------------
def init_params(key):
    ks = jax.random.split(key, 32)
    kiter = iter(ks)
    c = 128

    def dense(kin, kout):
        k = next(kiter)
        scale = 1.0 / jnp.sqrt(jnp.float32(kin))
        w = jax.random.normal(k, (kin, kout), jnp.float32) * scale
        b = jnp.zeros((1, kout), jnp.float32)
        return w, b

    # Block1: 30 -> 128 ; Blocks 2..6: 128 -> 128.  Layer-0 weight is zero-padded
    # along its input dim to 128 (x is zero-padded to match -> exactly equivalent).
    w0, b0 = dense(30, c)
    w0 = jnp.zeros((c, c), jnp.float32).at[:30, :].set(w0)
    ws, bs = [w0], [b0]
    for _ in range(5):
        w, b = dense(c, c)
        ws.append(w)
        bs.append(b)

    params = {
        "w_stack": jnp.stack(ws).astype(jnp.bfloat16),  # [6, 128, 128] bf16
        "b_stack": jnp.stack(bs),                       # [6, 1, 128]  f32
    }

    # Head (is_compare_net=1): fc1: 128 -> 64, fc2: 64 -> 128.
    params["fc1_w"], params["fc1_b"] = dense(128, 64)
    params["fc2_w"], params["fc2_b"] = dense(64, 128)

    # JumpingKnowledge('lstm', channels=128, num_layers=6):
    #   hidden = (6 * 128) // 2 = 384, bidirectional, att: 768 -> 1
    chan, hid = 128, (6 * 128) // 2
    jk = {}
    for tag in ("f", "b"):
        jk[f"wih_{tag}"] = jax.random.normal(next(kiter), (4 * hid, chan), jnp.float32) * 0.05
        jk[f"whh_{tag}"] = jax.random.normal(next(kiter), (4 * hid, hid), jnp.float32) * 0.05
        jk[f"bih_{tag}"] = jnp.zeros((4 * hid,), jnp.float32)
        jk[f"bhh_{tag}"] = jnp.zeros((4 * hid,), jnp.float32)
    jk["att_w"] = jax.random.normal(next(kiter), (2 * hid,), jnp.float32) * 0.05
    jk["att_b"] = jnp.float32(0.0)
    params["jk"] = jk
    return params


# ----------------------------------------------------------------------------
# Forward pass (CompareGCN == GCN(is_compare_net=1); returns (out, None))
# ----------------------------------------------------------------------------
def compare_gcn_forward(params, x, adj, pool):
    n, f_in = x.shape
    c = params["w_stack"].shape[-1]

    # Zero-pad the 30 input channels to 128 so layer 0's matmul is lane-dense.
    x_pad = jnp.zeros((n, c), jnp.bfloat16).at[:, :f_in].set(x.astype(jnp.bfloat16))

    supers = fused_gcn(adj.astype(jnp.bfloat16), x_pad,
                       params["w_stack"], params["b_stack"],
                       pool.astype(jnp.bfloat16))          # [6, G, 128] f32
    # F.dropout(training=False) on each super node == identity.
    # TODO(synk): SelectStruct2 (GetImportantStruct) after Block3 is an undefined
    # external sparsifier; treated as identity.

    z = jumping_knowledge_lstm(supers, params["jk"])       # [G, 128]

    # Head: fc1 -> relu -> (dropout: identity) -> fc2 (64->128) -> log_softmax.
    # Kept in plain JAX: too small to amortize a pallas_call.
    h = jnp.maximum(z @ params["fc1_w"] + params["fc1_b"], 0.0)
    out = h @ params["fc2_w"] + params["fc2_b"]
    out = jax.nn.log_softmax(out, axis=1)
    return out, None                                       # (out, strong_out)


# ----------------------------------------------------------------------------
# Main
# ----------------------------------------------------------------------------
if __name__ == "__main__":
    key = jax.random.PRNGKey(0)
    k_x, k_e, k_p = jax.random.split(key, 3)

    # Small synthetic batch: 2 graphs, 8 nodes each, 30 node features,
    # ring topology per graph, 7-dim edge features (unused, see TODO).
    num_graphs = 2
    nodes_per_graph = 8
    n = num_graphs * nodes_per_graph

    x = jax.random.normal(k_x, (n, 30), jnp.float32)
    batch = jnp.repeat(jnp.arange(num_graphs), nodes_per_graph)

    src, dst = [], []
    for g in range(num_graphs):
        base = g * nodes_per_graph
        for i in range(nodes_per_graph):
            a, b = base + i, base + (i + 1) % nodes_per_graph
            src += [a, b]
            dst += [b, a]
    edge_index = jnp.array([src, dst], dtype=jnp.int32)          # [2, E]
    edge_inform = jax.random.normal(k_e, (edge_index.shape[1], 7), jnp.float32)
    # TODO(synk): edge_inform (7 -> 14 transform inside Block) has no defined
    # semantics in the reference and is not used.

    adj = build_norm_adj(edge_index, n)          # [N, N]
    pool = build_mean_pool(batch, num_graphs)    # [G, N]

    params = init_params(k_p)

    fwd = jax.jit(functools.partial(compare_gcn_forward, params))
    out, strong_out = fwd(x, adj, pool)
    jax.block_until_ready(out)

    assert out.shape == (num_graphs, 128)
    assert strong_out is None
    assert bool(jnp.all(jnp.isfinite(out)))
    print("KERNEL_OK")
</pallas_src>

<mosaic_0001>
module attributes {stable_mosaic.version = 11 : i64} {
  func.func @fused_gcn_kernel(%arg0: i32, %arg1: i32, %arg2: memref<16x16xbf16, #tpu.memory_space<vmem>>, %arg3: memref<16x128xbf16, #tpu.memory_space<vmem>>, %arg4: memref<1x128x128xbf16, #tpu.memory_space<vmem>>, %arg5: memref<1x1x128xf32, #tpu.memory_space<vmem>>, %arg6: memref<2x16xbf16, #tpu.memory_space<vmem>>, %arg7: memref<1x2x128xf32, #tpu.memory_space<vmem>>, %arg8: memref<16x128xbf16, #tpu.memory_space<vmem>>, %arg9: memref<16x128xbf16, #tpu.memory_space<vmem>>) attributes {dimension_semantics = [#tpu.dimension_semantics<arbitrary>, #tpu.dimension_semantics<arbitrary>], iteration_bounds = array<i64: 6, 1>, scalar_prefetch = 0 : i64, scratch_operands = 2 : i64, tpu.core_type = #tpu.core_type<tc>, window_params = [{transform_indices = @transform_0, window_bounds = array<i64: 16, 16>}, {pipeline_mode = #tpu.pipeline_mode<synchronous>, transform_indices = @transform_1, window_bounds = array<i64: 16, 128>}, {transform_indices = @transform_2, window_bounds = array<i64: 1, 128, 128>}, {transform_indices = @transform_3, window_bounds = array<i64: 1, 1, 128>}, {transform_indices = @transform_4, window_bounds = array<i64: 2, 16>}, {transform_indices = @transform_5, window_bounds = array<i64: 1, 2, 128>}]} {
    %c0_i32 = arith.constant 0 : i32
    %0 = arith.cmpi eq, %arg1, %c0_i32 : i32
    %c0_i32_0 = arith.constant 0 : i32
    %1 = arith.cmpi eq, %arg0, %c0_i32_0 : i32
    %2 = arith.andi %0, %1 : i1
    %3 = arith.extui %2 : i1 to i32
    %c0_i32_1 = arith.constant 0 : i32
    %4 = arith.cmpi ne, %3, %c0_i32_1 : i32
    scf.if %4 {
      %c0_24 = arith.constant 0 : index
      %c0_25 = arith.constant 0 : index
      %36 = vector.load %arg3[%c0_24, %c0_25] : memref<16x128xbf16, #tpu.memory_space<vmem>>, vector<16x128xbf16>
      %c0_26 = arith.constant 0 : index
      %c0_27 = arith.constant 0 : index
      %c0_28 = arith.constant 0 : index
      %37 = vector.load %arg4[%c0_26, %c0_27, %c0_28] : memref<1x128x128xbf16, #tpu.memory_space<vmem>>, vector<1x128x128xbf16>
      %38 = vector.shape_cast %37 : vector<1x128x128xbf16> to vector<128x128xbf16>
      %cst_29 = arith.constant dense<0.000000e+00> : vector<16x128xf32>
      %39 = tpu.matmul %36, %38, %cst_29 {dimension_numbers = #tpu.dot_dimension_numbers<[1], [0], [0], [1], [0, 0, 1, 1], [], []>} : vector<16x128xbf16>, vector<128x128xbf16>, vector<16x128xf32> -> vector<16x128xf32>
      %40 = arith.truncf %39 : vector<16x128xf32> to vector<16x128xbf16>
      %c0_30 = arith.constant 0 : index
      %c0_31 = arith.constant 0 : index
      %41 = vector.load %arg9[%c0_30, %c0_31] : memref<16x128xbf16, #tpu.memory_space<vmem>>, vector<16x128xbf16>
      tpu.vector_store %arg9[%c0_30, %c0_31], %40 {strides = array<i32>} : memref<16x128xbf16, #tpu.memory_space<vmem>>, vector<16x128xbf16>,
    } else {
    }
    %c0_i32_2 = arith.constant 0 : i32
    %5 = arith.cmpi eq, %arg1, %c0_i32_2 : i32
    %c0_i32_3 = arith.constant 0 : i32
    %6 = arith.cmpi sgt, %arg0, %c0_i32_3 : i32
    %7 = arith.andi %5, %6 : i1
    %8 = arith.extui %7 : i1 to i32
    %c0_i32_4 = arith.constant 0 : i32
    %9 = arith.cmpi ne, %8, %c0_i32_4 : i32
    scf.if %9 {
      %c0_24 = arith.constant 0 : index
      %c0_25 = arith.constant 0 : index
      %36 = vector.load %arg8[%c0_24, %c0_25] : memref<16x128xbf16, #tpu.memory_space<vmem>>, vector<16x128xbf16>
      %c0_26 = arith.constant 0 : index
      %c0_27 = arith.constant 0 : index
      %c0_28 = arith.constant 0 : index
      %37 = vector.load %arg4[%c0_26, %c0_27, %c0_28] : memref<1x128x128xbf16, #tpu.memory_space<vmem>>, vector<1x128x128xbf16>
      %38 = vector.shape_cast %37 : vector<1x128x128xbf16> to vector<128x128xbf16>
      %cst_29 = arith.constant dense<0.000000e+00> : vector<16x128xf32>
      %39 = tpu.matmul %36, %38, %cst_29 {dimension_numbers = #tpu.dot_dimension_numbers<[1], [0], [0], [1], [0, 0, 1, 1], [], []>} : vector<16x128xbf16>, vector<128x128xbf16>, vector<16x128xf32> -> vector<16x128xf32>
      %40 = arith.truncf %39 : vector<16x128xf32> to vector<16x128xbf16>
      %c0_30 = arith.constant 0 : index
      %c0_31 = arith.constant 0 : index
      %41 = vector.load %arg9[%c0_30, %c0_31] : memref<16x128xbf16, #tpu.memory_space<vmem>>, vector<16x128xbf16>
      tpu.vector_store %arg9[%c0_30, %c0_31], %40 {strides = array<i32>} : memref<16x128xbf16, #tpu.memory_space<vmem>>, vector<16x128xbf16>,
    } else {
    }
    %c0 = arith.constant 0 : index
    %c0_5 = arith.constant 0 : index
    %10 = vector.load %arg2[%c0, %c0_5] : memref<16x16xbf16, #tpu.memory_space<vmem>>, vector<16x16xbf16>
    %c0_6 = arith.constant 0 : index
    %c0_7 = arith.constant 0 : index
    %11 = vector.load %arg9[%c0_6, %c0_7] : memref<16x128xbf16, #tpu.memory_space<vmem>>, vector<16x128xbf16>
    %cst = arith.constant dense<0.000000e+00> : vector<16x128xf32>
    %12 = tpu.matmul %10, %11, %cst {dimension_numbers = #tpu.dot_dimension_numbers<[1], [0], [0], [1], [0, 0, 1, 1], [], []>} : vector<16x16xbf16>, vector<16x128xbf16>, vector<16x128xf32> -> vector<16x128xf32>
    %c0_8 = arith.constant 0 : index
    %c0_9 = arith.constant 0 : index
    %c0_10 = arith.constant 0 : index
    %13 = vector.load %arg5[%c0_8, %c0_9, %c0_10] : memref<1x1x128xf32, #tpu.memory_space<vmem>>, vector<1x1x128xf32>
    %14 = vector.shape_cast %13 : vector<1x1x128xf32> to vector<1x128xf32>
    %15 = vector.broadcast %14 : vector<1x128xf32> to vector<16x128xf32>
    %16 = arith.addf %12, %15 : vector<16x128xf32>
    %cst_11 = arith.constant 0.000000e+00 : f32
    %17 = vector.broadcast %cst_11 : f32 to vector<16x128xf32>
    %18 = arith.maximumf %16, %17 : vector<16x128xf32>
    %19 = arith.truncf %18 : vector<16x128xf32> to vector<16x128xbf16>
    %c16_i32 = arith.constant 16 : i32
    %20 = arith.muli %arg1, %c16_i32 : i32
    %21 = tpu.assume_multiple %20, 16 : i32
    %c5_i32 = arith.constant 5 : i32
    %22 = arith.cmpi slt, %arg0, %c5_i32 : i32
    %23 = arith.extui %22 : i1 to i32
    %c0_i32_12 = arith.constant 0 : i32
    %24 = arith.cmpi ne, %23, %c0_i32_12 : i32
    scf.if %24 {
      %36 = arith.index_cast %21 : i32 to index
      %c0_24 = arith.constant 0 : index
      %37 = vector.load %arg8[%36, %c0_24] : memref<16x128xbf16, #tpu.memory_space<vmem>>, vector<16x128xbf16>
      tpu.vector_store %arg8[%36, %c0_24], %19 {strides = array<i32>} : memref<16x128xbf16, #tpu.memory_space<vmem>>, vector<16x128xbf16>,
    } else {
    }
    %c0_i32_13 = arith.constant 0 : i32
    %25 = arith.cmpi eq, %arg1, %c0_i32_13 : i32
    %26 = arith.extui %25 : i1 to i32
    %c0_i32_14 = arith.constant 0 : i32
    %27 = arith.cmpi ne, %26, %c0_i32_14 : i32
    scf.if %27 {
      %cst_24 = arith.constant 0.000000e+00 : f32
      %36 = vector.broadcast %cst_24 : f32 to vector<1x2x128xf32>
      %c0_25 = arith.constant 0 : index
      %c0_26 = arith.constant 0 : index
      %c0_27 = arith.constant 0 : index
      %37 = vector.load %arg7[%c0_25, %c0_26, %c0_27] : memref<1x2x128xf32, #tpu.memory_space<vmem>>, vector<1x2x128xf32>
      tpu.vector_store %arg7[%c0_25, %c0_26, %c0_27], %36 {strides = array<i32>} : memref<1x2x128xf32, #tpu.memory_space<vmem>>, vector<1x2x128xf32>,
    } else {
    }
    %c0_15 = arith.constant 0 : index
    %c0_16 = arith.constant 0 : index
    %c0_17 = arith.constant 0 : index
    %28 = vector.load %arg7[%c0_15, %c0_16, %c0_17] : memref<1x2x128xf32, #tpu.memory_space<vmem>>, vector<1x2x128xf32>
    %29 = vector.shape_cast %28 : vector<1x2x128xf32> to vector<2x128xf32>
    %c0_18 = arith.constant 0 : index
    %c0_19 = arith.constant 0 : index
    %30 = vector.load %arg6[%c0_18, %c0_19] : memref<2x16xbf16, #tpu.memory_space<vmem>>, vector<2x16xbf16>
    %cst_20 = arith.constant dense<0.000000e+00> : vector<2x128xf32>
    %31 = tpu.matmul %30, %19, %cst_20 {dimension_numbers = #tpu.dot_dimension_numbers<[1], [0], [0], [1], [0, 0, 1, 1], [], []>} : vector<2x16xbf16>, vector<16x128xbf16>, vector<2x128xf32> -> vector<2x128xf32>
    %32 = arith.addf %29, %31 : vector<2x128xf32>
    %c0_21 = arith.constant 0 : index
    %c0_22 = arith.constant 0 : index
    %c0_23 = arith.constant 0 : index
    %33 = vector.load %arg7[%c0_21, %c0_22, %c0_23] : memref<1x2x128xf32, #tpu.memory_space<vmem>>, vector<1x2x128xf32>
    %34 = vector.shape_cast %33 : vector<1x2x128xf32> to vector<2x128xf32>
    %35 = vector.shape_cast %32 : vector<2x128xf32> to vector<1x2x128xf32>
    tpu.vector_store %arg7[%c0_21, %c0_22, %c0_23], %35 {strides = array<i32>} : memref<1x2x128xf32, #tpu.memory_space<vmem>>, vector<1x2x128xf32>,
    return
  }
  func.func @transform_0(%arg0: i32, %arg1: i32) -> (i32, i32) {
    %c0_i32 = arith.constant 0 : i32
    %c0_i32_0 = arith.constant 0 : i32
    return %arg1, %c0_i32 : i32, i32
  }
  func.func @transform_1(%arg0: i32, %arg1: i32) -> (i32, i32) {
    %c0_i32 = arith.constant 0 : i32
    %c0_i32_0 = arith.constant 0 : i32
    %c0_i32_1 = arith.constant 0 : i32
    return %c0_i32, %c0_i32_0 : i32, i32
  }
  func.func @transform_2(%arg0: i32, %arg1: i32) -> (i32, i32, i32) {
    %c0_i32 = arith.constant 0 : i32
    %c0_i32_0 = arith.constant 0 : i32
    %c0_i32_1 = arith.constant 0 : i32
    return %arg0, %c0_i32, %c0_i32_0 : i32, i32, i32
  }
  func.func @transform_3(%arg0: i32, %arg1: i32) -> (i32, i32, i32) {
    %c0_i32 = arith.constant 0 : i32
    %c0_i32_0 = arith.constant 0 : i32
    %c0_i32_1 = arith.constant 0 : i32
    return %arg0, %c0_i32, %c0_i32_0 : i32, i32, i32
  }
  func.func @transform_4(%arg0: i32, %arg1: i32) -> (i32, i32) {
    %c0_i32 = arith.constant 0 : i32
    %c0_i32_0 = arith.constant 0 : i32
    return %c0_i32, %arg1 : i32, i32
  }
  func.func @transform_5(%arg0: i32, %arg1: i32) -> (i32, i32, i32) {
    %c0_i32 = arith.constant 0 : i32
    %c0_i32_0 = arith.constant 0 : i32
    %c0_i32_1 = arith.constant 0 : i32
    return %arg0, %c0_i32, %c0_i32_0 : i32, i32, i32
  }
}

</mosaic_0001>

<llo_original>
// kernel: custom-call.3
$region0: #{custom-call.3}
  %s0 = inlined_call_operand.vmem [shape: f32[2,384], index: 0, kind: output, shape index: {}]

// kernel: custom-call.2
$region0: #{custom-call.2}
  %s0 = inlined_call_operand.vmem [shape: bf16[2,384], index: 0, kind: output, shape index: {}]

</llo_original>
